<compile_context>
chip_gen: v7x
topology: tpu7x:2x2x1
jax: 0.10.0
libtpu: 0.0.40
codegen_flags: <defaults>
</compile_context>

<pallas_src>
import functools

import jax
import jax.numpy as jnp
from jax import lax
from jax.experimental import pallas as pl
from jax.experimental.pallas import tpu as pltpu

# Batch packing: one chunk = 8 sublanes x 256 lanes = 2048 batch elements.
_LANES = 256
_SUBLANES = 8
_CHUNK = _SUBLANES * _LANES


def _vmem_capacity_bytes():
    """Physical VMEM per TensorCore; conservative fallback = v7x (64 MiB)."""
    try:
        return int(pltpu.get_tpu_info().vmem_capacity_bytes)
    except Exception:
        return 64 * 1024 * 1024


def _sigmoid(z):
    # sigmoid(z) == 0.5*tanh(0.5*z) + 0.5 : one EUP op instead of exp + divide.
    return 0.5 * jnp.tanh(0.5 * z) + 0.5


def _mlp_kernel(w1_ref, b1_ref, w2_ref, b2_ref, x_ref, o_ref, *, unroll):
    """Per-tile MLP.

    w1_ref: (in_dim, hidden)                 SMEM f32
    b1_ref: (1, hidden)                      SMEM f32
    w2_ref: (hidden, out_dim)                SMEM f32
    b2_ref: (1, out_dim)                     SMEM f32
    x_ref : (in_dim,  chunks, 8, LANES)      VMEM f32  (batch on sublanes+lanes)
    o_ref : (out_dim, chunks, 8, LANES)      VMEM f32  (lane-dense stores)
    """
    in_dim, n_chunks = x_ref.shape[0], x_ref.shape[1]
    hidden = w1_ref.shape[1]
    out_dim = w2_ref.shape[1]

    # Hoist the tiny scalar weight tables out of the chunk loop.
    w1 = [[w1_ref[i, j] for j in range(hidden)] for i in range(in_dim)]
    b1 = [b1_ref[0, j] for j in range(hidden)]
    w2 = [[w2_ref[j, o] for o in range(out_dim)] for j in range(hidden)]
    b2 = [b2_ref[0, o] for o in range(out_dim)]

    def chunk_body(c, carry):
        # Full-occupancy (8, LANES) slabs, one per input feature.
        xs = [x_ref[i, c] for i in range(in_dim)]

        # Layer 1: h_j = sigmoid(b1_j + sum_i w1[i, j] * x_i)   (VPU FMAs)
        hs = []
        for j in range(hidden):
            acc = xs[0] * w1[0][j] + b1[j]
            for i in range(1, in_dim):
                acc = acc + xs[i] * w1[i][j]
            hs.append(_sigmoid(acc))

        # Layer 2 + final sigmoid + *5   (5*sigmoid(z) == 2.5*tanh(z/2) + 2.5)
        for o in range(out_dim):
            acc = hs[0] * w2[0][o] + b2[o]
            for j in range(1, hidden):
                acc = acc + hs[j] * w2[j][o]
            o_ref[o, c] = 2.5 * jnp.tanh(0.5 * acc) + 2.5
        return carry

    # Strip-mine over 2048-element chunks so live vregs stay ~25 (no spills),
    # independent of how large the VMEM tile is.
    lax.fori_loop(0, n_chunks, chunk_body, 0, unroll=unroll)


def torch_model_forward(x, w1, b1, w2, b2):
    """x: (B, in_dim) f32. w1: (in_dim, hidden), b1: (1, hidden),
    w2: (hidden, out_dim), b2: (1, out_dim). Returns (B, out_dim) f32."""
    B, in_dim = x.shape
    hidden = w1.shape[1]
    out_dim = w2.shape[1]

    # ---- Tile / grid selection (generation-aware) -------------------------
    # Double-buffered HBM<->VMEM bytes per chunk (inputs + outputs).
    bytes_per_chunk = _CHUNK * (in_dim + out_dim) * 4 * 2
    vmem = _vmem_capacity_bytes()
    #   v7x   (64 MiB/TC): budget ~24 MiB -> ~190 chunks (~0.39M elems / tile)
    #   v5e/v6e (128 MiB):  capped at 256 chunks (~0.52M elems / tile)
    tile_budget = min(3 * vmem // 8, 40 * 1024 * 1024)
    max_chunks_per_tile = max(1, min(256, tile_budget // bytes_per_chunk))

    n_chunks = pl.cdiv(B, _CHUNK)
    n_tiles = pl.cdiv(n_chunks, max_chunks_per_tile)
    if n_chunks >= 2:
        n_tiles = max(n_tiles, 2)          # give both v7x TensorCores work
    if n_tiles > 1 and n_tiles % 2 == 1:
        n_tiles += 1                       # even step count for 2-TC sharding
    chunks_per_tile = pl.cdiv(n_chunks, n_tiles)   # even split -> minimal pad
    total_chunks = n_tiles * chunks_per_tile
    b_pad = total_chunks * _CHUNK

    # ---- Host-side relayout: batch onto (chunk, sublane, lane) ------------
    # Single fused pad-of-transpose; the reshape is a free row-major view.
    # Batch index b maps to (chunk, sublane, lane) = divmod chain of 2048/256.
    # TODO(synk): fold this transpose into the kernel (XLU slack) to drop the
    # extra HBM read+write of x at very large batch sizes.
    xT = jnp.pad(x.astype(jnp.float32).T, ((0, 0), (0, b_pad - B)))
    x4 = xT.reshape(in_dim, total_chunks, _SUBLANES, _LANES)

    kernel = functools.partial(_mlp_kernel, unroll=min(4, chunks_per_tile))

    cost = pl.CostEstimate(
        flops=2 * b_pad * (in_dim * hidden + hidden * out_dim),
        transcendentals=b_pad * (hidden + out_dim),
        bytes_accessed=4 * (b_pad * (in_dim + out_dim)
                            + in_dim * hidden + hidden
                            + hidden * out_dim + out_dim),
    )

    # 32 MiB scoped on v7x (64 MiB physical), 64 MiB on v5e/v6e (128 MiB).
    vmem_limit = min(vmem // 2, 64 * 1024 * 1024)

    o4 = pl.pallas_call(
        kernel,
        out_shape=jax.ShapeDtypeStruct(
            (out_dim, total_chunks, _SUBLANES, _LANES), jnp.float32),
        grid=(n_tiles,),
        in_specs=[
            # Tiny scalar tables -> SMEM, resident across all grid steps.
            pl.BlockSpec(memory_space=pltpu.MemorySpace.SMEM),   # w1
            pl.BlockSpec(memory_space=pltpu.MemorySpace.SMEM),   # b1
            pl.BlockSpec(memory_space=pltpu.MemorySpace.SMEM),   # w2
            pl.BlockSpec(memory_space=pltpu.MemorySpace.SMEM),   # b2
            # Batch-tiled input, batch packed on sublanes + lanes.
            pl.BlockSpec((in_dim, chunks_per_tile, _SUBLANES, _LANES),
                         lambda t: (0, t, 0, 0)),
        ],
        out_specs=pl.BlockSpec((out_dim, chunks_per_tile, _SUBLANES, _LANES),
                               lambda t: (0, t, 0, 0)),
        compiler_params=pltpu.CompilerParams(
            dimension_semantics=("parallel",),   # v7x: shard batch on 2 TCs
            vmem_limit_bytes=vmem_limit,
        ),
        cost_estimate=cost,
    )(w1.astype(jnp.float32), b1.astype(jnp.float32),
      w2.astype(jnp.float32), b2.astype(jnp.float32), x4)

    # Undo the packing; drop batch padding. Back to PyTorch (B, out_dim).
    return o4.reshape(out_dim, b_pad)[:, :B].T


def init_params(key, in_dim=7, hidden_dim=3, out_dim=1):
    """Deterministic init mimicking nn.Linear's uniform(-1/sqrt(fan_in), ...)."""
    k1, k2, k3, k4 = jax.random.split(key, 4)
    bound1 = 1.0 / jnp.sqrt(in_dim)
    bound2 = 1.0 / jnp.sqrt(hidden_dim)
    # PyTorch stores weight as (out, in); we keep the transposed (in, out) layout.
    w1 = jax.random.uniform(k1, (in_dim, hidden_dim), jnp.float32, -bound1, bound1)
    b1 = jax.random.uniform(k2, (1, hidden_dim), jnp.float32, -bound1, bound1)
    w2 = jax.random.uniform(k3, (hidden_dim, out_dim), jnp.float32, -bound2, bound2)
    b2 = jax.random.uniform(k4, (1, out_dim), jnp.float32, -bound2, bound2)
    return w1, b1, w2, b2


if __name__ == "__main__":
    key = jax.random.PRNGKey(0)
    k_x, k_p = jax.random.split(key)

    B, in_dim, hidden_dim, out_dim = 8, 7, 3, 1
    x = jax.random.normal(k_x, (B, in_dim), dtype=jnp.float32)
    w1, b1, w2, b2 = init_params(k_p, in_dim, hidden_dim, out_dim)

    out = torch_model_forward(x, w1, b1, w2, b2)
    out = jax.block_until_ready(out)

    # Pure-JAX reference check (same math, outside Pallas).
    ref = jax.nn.sigmoid(jax.nn.sigmoid(x @ w1 + b1) @ w2 + b2) * 5.0
    assert out.shape == (B, out_dim)
    assert jnp.allclose(out, ref, atol=1e-5, rtol=1e-5)

    print("KERNEL_OK")
</pallas_src>

<mosaic_0001>
module attributes {stable_mosaic.version = 11 : i64} {
  func.func @_mlp_kernel(%arg0: i32, %arg1: memref<7x3xf32, #tpu.memory_space<smem>>, %arg2: memref<1x3xf32, #tpu.memory_space<smem>>, %arg3: memref<3x1xf32, #tpu.memory_space<smem>>, %arg4: memref<1x1xf32, #tpu.memory_space<smem>>, %arg5: memref<7x1x8x256xf32, #tpu.memory_space<vmem>>, %arg6: memref<1x1x8x256xf32, #tpu.memory_space<vmem>>) attributes {dimension_semantics = [#tpu.dimension_semantics<parallel>], iteration_bounds = array<i64: 1>, scalar_prefetch = 0 : i64, scratch_operands = 0 : i64, tpu.core_type = #tpu.core_type<tc>, window_params = [{transform_indices = @transform_0, window_bounds = array<i64: 7, 3>}, {transform_indices = @transform_1, window_bounds = array<i64: 1, 3>}, {transform_indices = @transform_2, window_bounds = array<i64: 3, 1>}, {transform_indices = @transform_3, window_bounds = array<i64: 1, 1>}, {transform_indices = @transform_4, window_bounds = array<i64: 7, 1, 8, 256>}, {transform_indices = @transform_5, window_bounds = array<i64: 1, 1, 8, 256>}]} {
    %c0 = arith.constant 0 : index
    %c0_0 = arith.constant 0 : index
    %0 = memref.load %arg1[%c0, %c0_0] : memref<7x3xf32, #tpu.memory_space<smem>>
    %c0_1 = arith.constant 0 : index
    %c1 = arith.constant 1 : index
    %1 = memref.load %arg1[%c0_1, %c1] : memref<7x3xf32, #tpu.memory_space<smem>>
    %c0_2 = arith.constant 0 : index
    %c2 = arith.constant 2 : index
    %2 = memref.load %arg1[%c0_2, %c2] : memref<7x3xf32, #tpu.memory_space<smem>>
    %c1_3 = arith.constant 1 : index
    %c0_4 = arith.constant 0 : index
    %3 = memref.load %arg1[%c1_3, %c0_4] : memref<7x3xf32, #tpu.memory_space<smem>>
    %c1_5 = arith.constant 1 : index
    %c1_6 = arith.constant 1 : index
    %4 = memref.load %arg1[%c1_5, %c1_6] : memref<7x3xf32, #tpu.memory_space<smem>>
    %c1_7 = arith.constant 1 : index
    %c2_8 = arith.constant 2 : index
    %5 = memref.load %arg1[%c1_7, %c2_8] : memref<7x3xf32, #tpu.memory_space<smem>>
    %c2_9 = arith.constant 2 : index
    %c0_10 = arith.constant 0 : index
    %6 = memref.load %arg1[%c2_9, %c0_10] : memref<7x3xf32, #tpu.memory_space<smem>>
    %c2_11 = arith.constant 2 : index
    %c1_12 = arith.constant 1 : index
    %7 = memref.load %arg1[%c2_11, %c1_12] : memref<7x3xf32, #tpu.memory_space<smem>>
    %c2_13 = arith.constant 2 : index
    %c2_14 = arith.constant 2 : index
    %8 = memref.load %arg1[%c2_13, %c2_14] : memref<7x3xf32, #tpu.memory_space<smem>>
    %c3 = arith.constant 3 : index
    %c0_15 = arith.constant 0 : index
    %9 = memref.load %arg1[%c3, %c0_15] : memref<7x3xf32, #tpu.memory_space<smem>>
    %c3_16 = arith.constant 3 : index
    %c1_17 = arith.constant 1 : index
    %10 = memref.load %arg1[%c3_16, %c1_17] : memref<7x3xf32, #tpu.memory_space<smem>>
    %c3_18 = arith.constant 3 : index
    %c2_19 = arith.constant 2 : index
    %11 = memref.load %arg1[%c3_18, %c2_19] : memref<7x3xf32, #tpu.memory_space<smem>>
    %c4 = arith.constant 4 : index
    %c0_20 = arith.constant 0 : index
    %12 = memref.load %arg1[%c4, %c0_20] : memref<7x3xf32, #tpu.memory_space<smem>>
    %c4_21 = arith.constant 4 : index
    %c1_22 = arith.constant 1 : index
    %13 = memref.load %arg1[%c4_21, %c1_22] : memref<7x3xf32, #tpu.memory_space<smem>>
    %c4_23 = arith.constant 4 : index
    %c2_24 = arith.constant 2 : index
    %14 = memref.load %arg1[%c4_23, %c2_24] : memref<7x3xf32, #tpu.memory_space<smem>>
    %c5 = arith.constant 5 : index
    %c0_25 = arith.constant 0 : index
    %15 = memref.load %arg1[%c5, %c0_25] : memref<7x3xf32, #tpu.memory_space<smem>>
    %c5_26 = arith.constant 5 : index
    %c1_27 = arith.constant 1 : index
    %16 = memref.load %arg1[%c5_26, %c1_27] : memref<7x3xf32, #tpu.memory_space<smem>>
    %c5_28 = arith.constant 5 : index
    %c2_29 = arith.constant 2 : index
    %17 = memref.load %arg1[%c5_28, %c2_29] : memref<7x3xf32, #tpu.memory_space<smem>>
    %c6 = arith.constant 6 : index
    %c0_30 = arith.constant 0 : index
    %18 = memref.load %arg1[%c6, %c0_30] : memref<7x3xf32, #tpu.memory_space<smem>>
    %c6_31 = arith.constant 6 : index
    %c1_32 = arith.constant 1 : index
    %19 = memref.load %arg1[%c6_31, %c1_32] : memref<7x3xf32, #tpu.memory_space<smem>>
    %c6_33 = arith.constant 6 : index
    %c2_34 = arith.constant 2 : index
    %20 = memref.load %arg1[%c6_33, %c2_34] : memref<7x3xf32, #tpu.memory_space<smem>>
    %c0_35 = arith.constant 0 : index
    %c0_36 = arith.constant 0 : index
    %21 = memref.load %arg2[%c0_35, %c0_36] : memref<1x3xf32, #tpu.memory_space<smem>>
    %c0_37 = arith.constant 0 : index
    %c1_38 = arith.constant 1 : index
    %22 = memref.load %arg2[%c0_37, %c1_38] : memref<1x3xf32, #tpu.memory_space<smem>>
    %c0_39 = arith.constant 0 : index
    %c2_40 = arith.constant 2 : index
    %23 = memref.load %arg2[%c0_39, %c2_40] : memref<1x3xf32, #tpu.memory_space<smem>>
    %c0_41 = arith.constant 0 : index
    %c0_42 = arith.constant 0 : index
    %24 = memref.load %arg3[%c0_41, %c0_42] : memref<3x1xf32, #tpu.memory_space<smem>>
    %c1_43 = arith.constant 1 : index
    %c0_44 = arith.constant 0 : index
    %25 = memref.load %arg3[%c1_43, %c0_44] : memref<3x1xf32, #tpu.memory_space<smem>>
    %c2_45 = arith.constant 2 : index
    %c0_46 = arith.constant 0 : index
    %26 = memref.load %arg3[%c2_45, %c0_46] : memref<3x1xf32, #tpu.memory_space<smem>>
    %c0_47 = arith.constant 0 : index
    %c0_48 = arith.constant 0 : index
    %27 = memref.load %arg4[%c0_47, %c0_48] : memref<1x1xf32, #tpu.memory_space<smem>>
    %c0_i32 = arith.constant 0 : i32
    %c0_49 = arith.constant 0 : index
    %28 = arith.index_cast %c0_i32 : i32 to index
    %c0_50 = arith.constant 0 : index
    %c0_51 = arith.constant 0 : index
    %29 = vector.load %arg5[%c0_49, %28, %c0_50, %c0_51] : memref<7x1x8x256xf32, #tpu.memory_space<vmem>>, vector<1x1x8x256xf32>
    %30 = vector.shape_cast %29 : vector<1x1x8x256xf32> to vector<8x256xf32>
    %c1_52 = arith.constant 1 : index
    %31 = arith.index_cast %c0_i32 : i32 to index
    %c0_53 = arith.constant 0 : index
    %c0_54 = arith.constant 0 : index
    %32 = vector.load %arg5[%c1_52, %31, %c0_53, %c0_54] : memref<7x1x8x256xf32, #tpu.memory_space<vmem>>, vector<1x1x8x256xf32>
    %33 = vector.shape_cast %32 : vector<1x1x8x256xf32> to vector<8x256xf32>
    %c2_55 = arith.constant 2 : index
    %34 = arith.index_cast %c0_i32 : i32 to index
    %c0_56 = arith.constant 0 : index
    %c0_57 = arith.constant 0 : index
    %35 = vector.load %arg5[%c2_55, %34, %c0_56, %c0_57] : memref<7x1x8x256xf32, #tpu.memory_space<vmem>>, vector<1x1x8x256xf32>
    %36 = vector.shape_cast %35 : vector<1x1x8x256xf32> to vector<8x256xf32>
    %c3_58 = arith.constant 3 : index
    %37 = arith.index_cast %c0_i32 : i32 to index
    %c0_59 = arith.constant 0 : index
    %c0_60 = arith.constant 0 : index
    %38 = vector.load %arg5[%c3_58, %37, %c0_59, %c0_60] : memref<7x1x8x256xf32, #tpu.memory_space<vmem>>, vector<1x1x8x256xf32>
    %39 = vector.shape_cast %38 : vector<1x1x8x256xf32> to vector<8x256xf32>
    %c4_61 = arith.constant 4 : index
    %40 = arith.index_cast %c0_i32 : i32 to index
    %c0_62 = arith.constant 0 : index
    %c0_63 = arith.constant 0 : index
    %41 = vector.load %arg5[%c4_61, %40, %c0_62, %c0_63] : memref<7x1x8x256xf32, #tpu.memory_space<vmem>>, vector<1x1x8x256xf32>
    %42 = vector.shape_cast %41 : vector<1x1x8x256xf32> to vector<8x256xf32>
    %c5_64 = arith.constant 5 : index
    %43 = arith.index_cast %c0_i32 : i32 to index
    %c0_65 = arith.constant 0 : index
    %c0_66 = arith.constant 0 : index
    %44 = vector.load %arg5[%c5_64, %43, %c0_65, %c0_66] : memref<7x1x8x256xf32, #tpu.memory_space<vmem>>, vector<1x1x8x256xf32>
    %45 = vector.shape_cast %44 : vector<1x1x8x256xf32> to vector<8x256xf32>
    %c6_67 = arith.constant 6 : index
    %46 = arith.index_cast %c0_i32 : i32 to index
    %c0_68 = arith.constant 0 : index
    %c0_69 = arith.constant 0 : index
    %47 = vector.load %arg5[%c6_67, %46, %c0_68, %c0_69] : memref<7x1x8x256xf32, #tpu.memory_space<vmem>>, vector<1x1x8x256xf32>
    %48 = vector.shape_cast %47 : vector<1x1x8x256xf32> to vector<8x256xf32>
    %49 = vector.broadcast %0 : f32 to vector<8x256xf32>
    %50 = arith.mulf %30, %49 : vector<8x256xf32>
    %51 = vector.broadcast %21 : f32 to vector<8x256xf32>
    %52 = arith.addf %50, %51 : vector<8x256xf32>
    %53 = vector.broadcast %3 : f32 to vector<8x256xf32>
    %54 = arith.mulf %33, %53 : vector<8x256xf32>
    %55 = arith.addf %52, %54 : vector<8x256xf32>
    %56 = vector.broadcast %6 : f32 to vector<8x256xf32>
    %57 = arith.mulf %36, %56 : vector<8x256xf32>
    %58 = arith.addf %55, %57 : vector<8x256xf32>
    %59 = vector.broadcast %9 : f32 to vector<8x256xf32>
    %60 = arith.mulf %39, %59 : vector<8x256xf32>
    %61 = arith.addf %58, %60 : vector<8x256xf32>
    %62 = vector.broadcast %12 : f32 to vector<8x256xf32>
    %63 = arith.mulf %42, %62 : vector<8x256xf32>
    %64 = arith.addf %61, %63 : vector<8x256xf32>
    %65 = vector.broadcast %15 : f32 to vector<8x256xf32>
    %66 = arith.mulf %45, %65 : vector<8x256xf32>
    %67 = arith.addf %64, %66 : vector<8x256xf32>
    %68 = vector.broadcast %18 : f32 to vector<8x256xf32>
    %69 = arith.mulf %48, %68 : vector<8x256xf32>
    %70 = arith.addf %67, %69 : vector<8x256xf32>
    %cst = arith.constant 5.000000e-01 : f32
    %71 = vector.broadcast %cst : f32 to vector<8x256xf32>
    %72 = arith.mulf %71, %70 : vector<8x256xf32>
    %73 = math.tanh %72 : vector<8x256xf32>
    %cst_70 = arith.constant 5.000000e-01 : f32
    %74 = vector.broadcast %cst_70 : f32 to vector<8x256xf32>
    %75 = arith.mulf %74, %73 : vector<8x256xf32>
    %cst_71 = arith.constant 5.000000e-01 : f32
    %76 = vector.broadcast %cst_71 : f32 to vector<8x256xf32>
    %77 = arith.addf %75, %76 : vector<8x256xf32>
    %78 = vector.broadcast %1 : f32 to vector<8x256xf32>
    %79 = arith.mulf %30, %78 : vector<8x256xf32>
    %80 = vector.broadcast %22 : f32 to vector<8x256xf32>
    %81 = arith.addf %79, %80 : vector<8x256xf32>
    %82 = vector.broadcast %4 : f32 to vector<8x256xf32>
    %83 = arith.mulf %33, %82 : vector<8x256xf32>
    %84 = arith.addf %81, %83 : vector<8x256xf32>
    %85 = vector.broadcast %7 : f32 to vector<8x256xf32>
    %86 = arith.mulf %36, %85 : vector<8x256xf32>
    %87 = arith.addf %84, %86 : vector<8x256xf32>
    %88 = vector.broadcast %10 : f32 to vector<8x256xf32>
    %89 = arith.mulf %39, %88 : vector<8x256xf32>
    %90 = arith.addf %87, %89 : vector<8x256xf32>
    %91 = vector.broadcast %13 : f32 to vector<8x256xf32>
    %92 = arith.mulf %42, %91 : vector<8x256xf32>
    %93 = arith.addf %90, %92 : vector<8x256xf32>
    %94 = vector.broadcast %16 : f32 to vector<8x256xf32>
    %95 = arith.mulf %45, %94 : vector<8x256xf32>
    %96 = arith.addf %93, %95 : vector<8x256xf32>
    %97 = vector.broadcast %19 : f32 to vector<8x256xf32>
    %98 = arith.mulf %48, %97 : vector<8x256xf32>
    %99 = arith.addf %96, %98 : vector<8x256xf32>
    %cst_72 = arith.constant 5.000000e-01 : f32
    %100 = vector.broadcast %cst_72 : f32 to vector<8x256xf32>
    %101 = arith.mulf %100, %99 : vector<8x256xf32>
    %102 = math.tanh %101 : vector<8x256xf32>
    %cst_73 = arith.constant 5.000000e-01 : f32
    %103 = vector.broadcast %cst_73 : f32 to vector<8x256xf32>
    %104 = arith.mulf %103, %102 : vector<8x256xf32>
    %cst_74 = arith.constant 5.000000e-01 : f32
    %105 = vector.broadcast %cst_74 : f32 to vector<8x256xf32>
    %106 = arith.addf %104, %105 : vector<8x256xf32>
    %107 = vector.broadcast %2 : f32 to vector<8x256xf32>
    %108 = arith.mulf %30, %107 : vector<8x256xf32>
    %109 = vector.broadcast %23 : f32 to vector<8x256xf32>
    %110 = arith.addf %108, %109 : vector<8x256xf32>
    %111 = vector.broadcast %5 : f32 to vector<8x256xf32>
    %112 = arith.mulf %33, %111 : vector<8x256xf32>
    %113 = arith.addf %110, %112 : vector<8x256xf32>
    %114 = vector.broadcast %8 : f32 to vector<8x256xf32>
    %115 = arith.mulf %36, %114 : vector<8x256xf32>
    %116 = arith.addf %113, %115 : vector<8x256xf32>
    %117 = vector.broadcast %11 : f32 to vector<8x256xf32>
    %118 = arith.mulf %39, %117 : vector<8x256xf32>
    %119 = arith.addf %116, %118 : vector<8x256xf32>
    %120 = vector.broadcast %14 : f32 to vector<8x256xf32>
    %121 = arith.mulf %42, %120 : vector<8x256xf32>
    %122 = arith.addf %119, %121 : vector<8x256xf32>
    %123 = vector.broadcast %17 : f32 to vector<8x256xf32>
    %124 = arith.mulf %45, %123 : vector<8x256xf32>
    %125 = arith.addf %122, %124 : vector<8x256xf32>
    %126 = vector.broadcast %20 : f32 to vector<8x256xf32>
    %127 = arith.mulf %48, %126 : vector<8x256xf32>
    %128 = arith.addf %125, %127 : vector<8x256xf32>
    %cst_75 = arith.constant 5.000000e-01 : f32
    %129 = vector.broadcast %cst_75 : f32 to vector<8x256xf32>
    %130 = arith.mulf %129, %128 : vector<8x256xf32>
    %131 = math.tanh %130 : vector<8x256xf32>
    %cst_76 = arith.constant 5.000000e-01 : f32
    %132 = vector.broadcast %cst_76 : f32 to vector<8x256xf32>
    %133 = arith.mulf %132, %131 : vector<8x256xf32>
    %cst_77 = arith.constant 5.000000e-01 : f32
    %134 = vector.broadcast %cst_77 : f32 to vector<8x256xf32>
    %135 = arith.addf %133, %134 : vector<8x256xf32>
    %136 = vector.broadcast %24 : f32 to vector<8x256xf32>
    %137 = arith.mulf %77, %136 : vector<8x256xf32>
    %138 = vector.broadcast %27 : f32 to vector<8x256xf32>
    %139 = arith.addf %137, %138 : vector<8x256xf32>
    %140 = vector.broadcast %25 : f32 to vector<8x256xf32>
    %141 = arith.mulf %106, %140 : vector<8x256xf32>
    %142 = arith.addf %139, %141 : vector<8x256xf32>
    %143 = vector.broadcast %26 : f32 to vector<8x256xf32>
    %144 = arith.mulf %135, %143 : vector<8x256xf32>
    %145 = arith.addf %142, %144 : vector<8x256xf32>
    %cst_78 = arith.constant 5.000000e-01 : f32
    %146 = vector.broadcast %cst_78 : f32 to vector<8x256xf32>
    %147 = arith.mulf %146, %145 : vector<8x256xf32>
    %148 = math.tanh %147 : vector<8x256xf32>
    %cst_79 = arith.constant 2.500000e+00 : f32
    %149 = vector.broadcast %cst_79 : f32 to vector<8x256xf32>
    %150 = arith.mulf %149, %148 : vector<8x256xf32>
    %cst_80 = arith.constant 2.500000e+00 : f32
    %151 = vector.broadcast %cst_80 : f32 to vector<8x256xf32>
    %152 = arith.addf %150, %151 : vector<8x256xf32>
    %c0_81 = arith.constant 0 : index
    %153 = arith.index_cast %c0_i32 : i32 to index
    %c0_82 = arith.constant 0 : index
    %c0_83 = arith.constant 0 : index
    %154 = vector.load %arg6[%c0_81, %153, %c0_82, %c0_83] : memref<1x1x8x256xf32, #tpu.memory_space<vmem>>, vector<1x1x8x256xf32>
    %155 = vector.shape_cast %154 : vector<1x1x8x256xf32> to vector<8x256xf32>
    %156 = vector.shape_cast %152 : vector<8x256xf32> to vector<1x1x8x256xf32>
    tpu.vector_store %arg6[%c0_81, %153, %c0_82, %c0_83], %156 {strides = array<i32>} : memref<1x1x8x256xf32, #tpu.memory_space<vmem>>, vector<1x1x8x256xf32>,
    %c1_i32 = arith.constant 1 : i32
    return
  }
  func.func @transform_0(%arg0: i32) -> (i32, i32) {
    %c0_i32 = arith.constant 0 : i32
    %c0_i32_0 = arith.constant 0 : i32
    %c0_i32_1 = arith.constant 0 : i32
    return %c0_i32, %c0_i32_0 : i32, i32
  }
  func.func @transform_1(%arg0: i32) -> (i32, i32) {
    %c0_i32 = arith.constant 0 : i32
    %c0_i32_0 = arith.constant 0 : i32
    %c0_i32_1 = arith.constant 0 : i32
    return %c0_i32, %c0_i32_0 : i32, i32
  }
  func.func @transform_2(%arg0: i32) -> (i32, i32) {
    %c0_i32 = arith.constant 0 : i32
    %c0_i32_0 = arith.constant 0 : i32
    %c0_i32_1 = arith.constant 0 : i32
    return %c0_i32, %c0_i32_0 : i32, i32
  }
  func.func @transform_3(%arg0: i32) -> (i32, i32) {
    %c0_i32 = arith.constant 0 : i32
    %c0_i32_0 = arith.constant 0 : i32
    %c0_i32_1 = arith.constant 0 : i32
    return %c0_i32, %c0_i32_0 : i32, i32
  }
  func.func @transform_4(%arg0: i32) -> (i32, i32, i32, i32) {
    %c0_i32 = arith.constant 0 : i32
    %c0_i32_0 = arith.constant 0 : i32
    %c0_i32_1 = arith.constant 0 : i32
    %c0_i32_2 = arith.constant 0 : i32
    return %c0_i32, %arg0, %c0_i32_0, %c0_i32_1 : i32, i32, i32, i32
  }
  func.func @transform_5(%arg0: i32) -> (i32, i32, i32, i32) {
    %c0_i32 = arith.constant 0 : i32
    %c0_i32_0 = arith.constant 0 : i32
    %c0_i32_1 = arith.constant 0 : i32
    %c0_i32_2 = arith.constant 0 : i32
    return %c0_i32, %arg0, %c0_i32_0, %c0_i32_1 : i32, i32, i32, i32
  }
}

</mosaic_0001>

<llo_original>
// kernel: tpu_custom_call.1
$region0: #{tpu_custom_call.1}
  #allocation0 [shape = 'u32[]', space=smem, size = 0x4, offset = 0x4, fixed_abs, tag = 'smem constant byte address 0x4 - core index']
  #allocation1 [shape = 'u32[144,128]{1,0:T(1,128)}', space=vmem, size = 0x12000, scoped, tag = 'internal scratch']
  #allocation2 [shape = 'f32[1,1]{1,0:T(1,128)S(6)}', space=smem, size = 0x200, scoped, tag = 'scoped memory for tpu_custom_call.1']
  %s0 = inlined_call_operand.vmem [shape: f32[7,3], index: 0, kind: input, shape index: {}]
  %s1 = inlined_call_operand.vmem [shape: f32[1,3], index: 1, kind: input, shape index: {}]
  %s2 = inlined_call_operand.vmem [shape: f32[3,1], index: 2, kind: input, shape index: {}]
  %s3 = inlined_call_operand.<no memory space> [shape: f32[1,1], index: 3, kind: input, shape index: {}]
  %s4 = inlined_call_operand.hbm [shape: f32[7,1,8,256], index: 4, kind: input, shape index: {}]
  %s5 = inlined_call_operand.hbm [shape: f32[1,1,8,256], index: 5, kind: output, shape index: {}]
  %s6 = sld [smem:[#allocation0]]
  $region46: #{tpu_custom_call.1} parent=0
    _
  %s8 = ssub.s32 1, %s6
  %s9 = scalar_select 0, %s8, %s6
  %10 = sst [smem:[#allocation2]] %s3
  $region1: #{tpu_custom_call.1} parent=0
    #allocation3 [shape = 'u8[4096]{0}', space=smem, size = 0x1000, scoped, tag = 'input window, operand 0, single buffered']
    #allocation4 [shape = 's32[1]{0}', space=sflag, size = 0x4, scoped, tag = 'scoped memory for tpu_custom_call.1']
    #allocation5 [shape = 's32[1]{0}', space=sflag, size = 0x4, scoped, tag = 'scoped memory for tpu_custom_call.1']
    #allocation6 [shape = 's32[1]{0}', space=sflag, size = 0x4, scoped, tag = 'scoped memory for tpu_custom_call.1']
    #allocation7 [shape = 'u8[512]{0}', space=smem, size = 0x200, scoped, tag = 'input window, operand 1, single buffered']
    #allocation8 [shape = 's32[1]{0}', space=sflag, size = 0x4, scoped, tag = 'scoped memory for tpu_custom_call.1']
    #allocation9 [shape = 'u8[2048]{0}', space=smem, size = 0x800, scoped, tag = 'input window, operand 2, single buffered']
    #allocation10 [shape = 'u8[57344]{0}', space=vmem, size = 0xe000, scoped, tag = 'input window, operand 4, single buffered']
    #allocation11 [shape = 'u8[8192]{0}', space=vmem, size = 0x2000, scoped, tag = 'output window, operand 0, single buffered']
    %11 = vsyncpa [#allocation6], 0
    %12 = vsyncpa [#allocation8], 0
    %13 = vsyncpa [#allocation4], 0
    %14 = vsyncpa [#allocation5], 0
    // Predicated region
    $region2: #{tpu_custom_call.1} parent=1 // pred_check
      _
    $region3: #{tpu_custom_call.1} parent=1 // pred_check_branch
      %16 = sbr.rel (0) target = $region5
    $region4: #{tpu_custom_call.1} parent=1 // pred_region
      %s18 = ssub.s32 128, 128
      %19 = vsyncadd [#allocation6], %s18
      %s21 = sshll.u32 %s0, 4
      %s22 = int_to_ptr.vmem [resolvable:$true] %s21
      %24 = dma.vmem_to_smem %s22, 128, [#allocation3], [#allocation6]
    $region5: #{tpu_custom_call.1} parent=1 // pred_fallthru
      _
    // Predicated region
    $region6: #{tpu_custom_call.1} parent=1 // pred_check
      _
    $region7: #{tpu_custom_call.1} parent=1 // pred_check_branch
      %26 = sbr.rel (0) target = $region9
    $region8: #{tpu_custom_call.1} parent=1 // pred_region
      %s28 = ssub.s32 16, 16
      %29 = vsyncadd [#allocation8], %s28
      %s31 = sshll.u32 %s1, 4
      %s32 = int_to_ptr.vmem [resolvable:$true] %s31
      %34 = dma.vmem_to_smem %s32, 16, [#allocation7], [#allocation8]
    $region9: #{tpu_custom_call.1} parent=1 // pred_fallthru
      _
    // Predicated region
    $region10: #{tpu_custom_call.1} parent=1 // pred_check
      _
    $region11: #{tpu_custom_call.1} parent=1 // pred_check_branch
      %36 = sbr.rel (0) target = $region13
    $region12: #{tpu_custom_call.1} parent=1 // pred_region
      %s38 = ssub.s32 64, 64
      %39 = vsyncadd [#allocation8], %s38
      %s41 = sshll.u32 %s2, 4
      %s42 = int_to_ptr.vmem [resolvable:$true] %s41
      %44 = dma.vmem_to_smem %s42, 64, [#allocation9], [#allocation8]
    $region13: #{tpu_custom_call.1} parent=1 // pred_fallthru
      _
    // Predicated region
    $region14: #{tpu_custom_call.1} parent=1 // pred_check
      _
    $region15: #{tpu_custom_call.1} parent=1 // pred_check_branch
      %46 = sbr.rel (0) target = $region17
    $region16: #{tpu_custom_call.1} parent=1 // pred_region
      _
    $region17: #{tpu_custom_call.1} parent=1 // pred_fallthru
      _
    // Predicated region
    $region18: #{tpu_custom_call.1} parent=1 // pred_check
      _
    $region19: #{tpu_custom_call.1} parent=1 // pred_check_branch
      %48 = sbr.rel (0) target = $region21
    $region20: #{tpu_custom_call.1} parent=1 // pred_region
      %s50 = ssub.s32 1792, 1792
      %51 = vsyncadd [#allocation4], %s50
      %s52 = sshll.u32 [#allocation10], 4
      %s53 = int_to_ptr.vmem [resolvable:$true] %s52
      %58 = dma.hbm_to_vmem [thread:$0]  %s4, 1792, %s53, [#allocation4], 256, 256, 16
    $region21: #{tpu_custom_call.1} parent=1 // pred_fallthru
      _
    // Predicated region
    $region22: #{tpu_custom_call.1} parent=1 // pred_check
      _
    $region23: #{tpu_custom_call.1} parent=1 // pred_check_branch
      %60 = sbr.rel (0) target = $region25
    $region24: #{tpu_custom_call.1} parent=1 // pred_region
      %61 = dma.done [#allocation6], 128
    $region25: #{tpu_custom_call.1} parent=1 // pred_fallthru
      _
    // Predicated region
    $region26: #{tpu_custom_call.1} parent=1 // pred_check
      _
    $region27: #{tpu_custom_call.1} parent=1 // pred_check_branch
      %63 = sbr.rel (0) target = $region29
    $region28: #{tpu_custom_call.1} parent=1 // pred_region
      %64 = dma.done [#allocation8], 16
    $region29: #{tpu_custom_call.1} parent=1 // pred_fallthru
      _
    // Predicated region
    $region30: #{tpu_custom_call.1} parent=1 // pred_check
      _
    $region31: #{tpu_custom_call.1} parent=1 // pred_check_branch
      %66 = sbr.rel (0) target = $region33
    $region32: #{tpu_custom_call.1} parent=1 // pred_region
      %67 = dma.done [#allocation8], 64
    $region33: #{tpu_custom_call.1} parent=1 // pred_fallthru
      _
    // Predicated region
    $region34: #{tpu_custom_call.1} parent=1 // pred_check
      _
    $region35: #{tpu_custom_call.1} parent=1 // pred_check_branch
      %69 = sbr.rel (0) target = $region37
    $region36: #{tpu_custom_call.1} parent=1 // pred_region
      %70 = dma.done [#allocation4], 1792
    $region37: #{tpu_custom_call.1} parent=1 // pred_fallthru
      _
    %71 = sfence
    %s72 = sld [smem:[#allocation3]]
    %s73 = sld [smem:[#allocation3 + $0x1]]
    %s74 = sld [smem:[#allocation3 + $0x2]]
    %s75 = sld [smem:[#allocation3 + $0x80]]
    %s76 = sld [smem:[#allocation3 + $0x81]]
    %s77 = sld [smem:[#allocation3 + $0x82]]
    %s78 = sld [smem:[#allocation3 + $0x100]]
    %s79 = sld [smem:[#allocation3 + $0x101]]
    %s80 = sld [smem:[#allocation3 + $0x102]]
    %s81 = sld [smem:[#allocation3 + $0x180]]
    %s82 = sld [smem:[#allocation3 + $0x181]]
    %s83 = sld [smem:[#allocation3 + $0x182]]
    %s84 = sld [smem:[#allocation3 + $0x200]]
    %s85 = sld [smem:[#allocation3 + $0x201]]
    %s86 = sld [smem:[#allocation3 + $0x202]]
    %s87 = sld [smem:[#allocation3 + $0x280]]
    %s88 = sld [smem:[#allocation3 + $0x281]]
    %s89 = sld [smem:[#allocation3 + $0x282]]
    %s90 = sld [smem:[#allocation3 + $0x300]]
    %s91 = sld [smem:[#allocation3 + $0x301]]
    %s92 = sld [smem:[#allocation3 + $0x302]]
    %s93 = sld [smem:[#allocation7]]
    %s94 = sld [smem:[#allocation7 + $0x1]]
    %s95 = sld [smem:[#allocation7 + $0x2]]
    %s96 = sld [smem:[#allocation9]]
    %s97 = sld [smem:[#allocation9 + $0x80]]
    %s98 = sld [smem:[#allocation9 + $0x100]]
    %s99 = sld [smem:[#allocation2]]
    %v100 = vld [vmem:[#allocation10] sm:$0xff]
    %v101 = vld [vmem:[#allocation10 + $0x8] sm:$0xff]
    %s102 = scalar_lea.vmem [#allocation10], 16
    %v103 = vld [vmem:[%s102] sm:$0xff]
    %v104 = vld [vmem:[%s102 + $0x8] sm:$0xff]
    %s105 = scalar_lea.vmem [#allocation10], 32
    %v106 = vld [vmem:[%s105] sm:$0xff]
    %v107 = vld [vmem:[%s105 + $0x8] sm:$0xff]
    %s108 = scalar_lea.vmem [#allocation10], 48
    %v109 = vld [vmem:[%s108] sm:$0xff]
    %v110 = vld [vmem:[%s108 + $0x8] sm:$0xff]
    %s111 = scalar_lea.vmem [#allocation10], 64
    %v112 = vld [vmem:[%s111] sm:$0xff]
    %v113 = vld [vmem:[%s111 + $0x8] sm:$0xff]
    %s114 = scalar_lea.vmem [#allocation10], 80
    %v115 = vld [vmem:[%s114] sm:$0xff]
    %v116 = vld [vmem:[%s114 + $0x8] sm:$0xff]
    %s117 = scalar_lea.vmem [#allocation10], 96
    %v118 = vld [vmem:[%s117] sm:$0xff]
    %v119 = vld [vmem:[%s117 + $0x8] sm:$0xff]
    %v120 = vstv %s72
    %v121 = vmul.f32 %v100, %v120
    %v122 = vmul.f32 %v101, %v120
    %v123 = vstv %s93
    %v124 = vadd.f32 %v121, %v123
    %v125 = vadd.f32 %v122, %v123
    %v126 = vstv %s75
    %v127 = vmul.f32 %v103, %v126
    %v128 = vmul.f32 %v104, %v126
    %v129 = vadd.f32 %v124, %v127
    %v130 = vadd.f32 %v125, %v128
    %v131 = vstv %s78
    %v132 = vmul.f32 %v106, %v131
    %v133 = vmul.f32 %v107, %v131
    %v134 = vadd.f32 %v129, %v132
    %v135 = vadd.f32 %v130, %v133
    %v136 = vstv %s81
    %v137 = vmul.f32 %v109, %v136
    %v138 = vmul.f32 %v110, %v136
    %v139 = vadd.f32 %v134, %v137
    %v140 = vadd.f32 %v135, %v138
    %v141 = vstv %s84
    %v142 = vmul.f32 %v112, %v141
    %v143 = vmul.f32 %v113, %v141
    %v144 = vadd.f32 %v139, %v142
    %v145 = vadd.f32 %v140, %v143
    %v146 = vstv %s87
    %v147 = vmul.f32 %v115, %v146
    %v148 = vmul.f32 %v116, %v146
    %v149 = vadd.f32 %v144, %v147
    %v150 = vadd.f32 %v145, %v148
    %v151 = vstv %s90
    %v152 = vmul.f32 %v118, %v151
    %v153 = vmul.f32 %v119, %v151
    %v154 = vadd.f32 %v149, %v152
    %v155 = vadd.f32 %v150, %v153
    %v156 = vmul.f32 %v154, 0.5
    %v157 = vmul.f32 %v155, 0.5
    %v158 = vtanh.pop %v156
    %v159 = vtanh.pop %v157
    %v160 = vmul.f32 %v158, 0.5
    %v161 = vmul.f32 %v159, 0.5
    %v162 = vadd.f32 %v160, 0.5
    %v163 = vadd.f32 %v161, 0.5
    %v164 = vstv %s73
    %v165 = vmul.f32 %v100, %v164
    %v166 = vmul.f32 %v101, %v164
    %v167 = vstv %s94
    %v168 = vadd.f32 %v165, %v167
    %v169 = vadd.f32 %v166, %v167
    %v170 = vstv %s76
    %v171 = vmul.f32 %v103, %v170
    %v172 = vmul.f32 %v104, %v170
    %v173 = vadd.f32 %v168, %v171
    %v174 = vadd.f32 %v169, %v172
    %v175 = vstv %s79
    %v176 = vmul.f32 %v106, %v175
    %v177 = vmul.f32 %v107, %v175
    %v178 = vadd.f32 %v173, %v176
    %v179 = vadd.f32 %v174, %v177
    %v180 = vstv %s82
    %v181 = vmul.f32 %v109, %v180
    %v182 = vmul.f32 %v110, %v180
    %v183 = vadd.f32 %v178, %v181
    %v184 = vadd.f32 %v179, %v182
    %v185 = vstv %s85
    %v186 = vmul.f32 %v112, %v185
    %v187 = vmul.f32 %v113, %v185
    %v188 = vadd.f32 %v183, %v186
    %v189 = vadd.f32 %v184, %v187
    %v190 = vstv %s88
    %v191 = vmul.f32 %v115, %v190
    %v192 = vmul.f32 %v116, %v190
    %v193 = vadd.f32 %v188, %v191
    %v194 = vadd.f32 %v189, %v192
    %v195 = vstv %s91
    %v196 = vmul.f32 %v118, %v195
    %v197 = vmul.f32 %v119, %v195
    %v198 = vadd.f32 %v193, %v196
    %v199 = vadd.f32 %v194, %v197
    %v200 = vmul.f32 %v198, 0.5
    %v201 = vmul.f32 %v199, 0.5
    %v202 = vtanh.pop %v200
    %v203 = vtanh.pop %v201
    %v204 = vmul.f32 %v202, 0.5
    %v205 = vmul.f32 %v203, 0.5
    %v206 = vadd.f32 %v204, 0.5
    %v207 = vadd.f32 %v205, 0.5
    %v208 = vstv %s74
    %v209 = vmul.f32 %v100, %v208
    %v210 = vmul.f32 %v101, %v208
    %v211 = vstv %s95
    %v212 = vadd.f32 %v209, %v211
    %v213 = vadd.f32 %v210, %v211
    %v214 = vstv %s77
    %v215 = vmul.f32 %v103, %v214
    %v216 = vmul.f32 %v104, %v214
    %v217 = vadd.f32 %v212, %v215
    %v218 = vadd.f32 %v213, %v216
    %v219 = vstv %s80
    %v220 = vmul.f32 %v106, %v219
    %v221 = vmul.f32 %v107, %v219
    %v222 = vadd.f32 %v217, %v220
    %v223 = vadd.f32 %v218, %v221
    %v224 = vstv %s83
    %v225 = vmul.f32 %v109, %v224
    %v226 = vmul.f32 %v110, %v224
    %v227 = vadd.f32 %v222, %v225
    %v228 = vadd.f32 %v223, %v226
    %v229 = vstv %s86
    %v230 = vmul.f32 %v112, %v229
    %v231 = vmul.f32 %v113, %v229
    %v232 = vadd.f32 %v227, %v230
    %v233 = vadd.f32 %v228, %v231
    %v234 = vstv %s89
    %v235 = vmul.f32 %v115, %v234
    %v236 = vmul.f32 %v116, %v234
    %v237 = vadd.f32 %v232, %v235
    %v238 = vadd.f32 %v233, %v236
    %v239 = vstv %s92
    %v240 = vmul.f32 %v118, %v239
    %v241 = vmul.f32 %v119, %v239
    %v242 = vadd.f32 %v237, %v240
    %v243 = vadd.f32 %v238, %v241
    %v244 = vmul.f32 %v242, 0.5
    %v245 = vmul.f32 %v243, 0.5
    %v246 = vtanh.pop %v244
    %v247 = vtanh.pop %v245
    %v248 = vmul.f32 %v246, 0.5
    %v249 = vmul.f32 %v247, 0.5
    %v250 = vadd.f32 %v248, 0.5
    %v251 = vadd.f32 %v249, 0.5
    %v252 = vstv %s96
    %v253 = vmul.f32 %v162, %v252
    %v254 = vmul.f32 %v163, %v252
    %v255 = vstv %s99
    %v256 = vadd.f32 %v253, %v255
    %v257 = vadd.f32 %v254, %v255
    %v258 = vstv %s97
    %v259 = vmul.f32 %v206, %v258
    %v260 = vmul.f32 %v207, %v258
    %v261 = vadd.f32 %v256, %v259
    %v262 = vadd.f32 %v257, %v260
    %v263 = vstv %s98
    %v264 = vmul.f32 %v250, %v263
    %v265 = vmul.f32 %v251, %v263
    %v266 = vadd.f32 %v261, %v264
    %v267 = vadd.f32 %v262, %v265
    %v268 = vmul.f32 %v266, 0.5
    %v269 = vmul.f32 %v267, 0.5
    %v270 = vtanh.pop %v268
    %v271 = vtanh.pop %v269
    %v272 = vmul.f32 %v270, 2.5
    %v273 = vmul.f32 %v271, 2.5
    %v274 = vadd.f32 %v272, 2.5
    %v275 = vadd.f32 %v273, 2.5
    %276 = vst [vmem:[#allocation11] sm:$0xff] %v274
    %277 = vst [vmem:[#allocation11 + $0x8] sm:$0xff] %v275
    // Predicated region
    $region38: #{tpu_custom_call.1} parent=1 // pred_check
      _
    $region39: #{tpu_custom_call.1} parent=1 // pred_check_branch
      %279 = sbr.rel (0) target = $region41
    $region40: #{tpu_custom_call.1} parent=1 // pred_region
      %s281 = ssub.s32 256, 256
      %282 = vsyncadd [#allocation5], %s281
      %s284 = sshll.u32 [#allocation11], 4
      %s285 = int_to_ptr.vmem [resolvable:$true] %s284
      %287 = dma.vmem_to_hbm [thread:$0]  %s285, 256, %s5, [#allocation5]
    $region41: #{tpu_custom_call.1} parent=1 // pred_fallthru
      _
    // Predicated region
    $region42: #{tpu_custom_call.1} parent=1 // pred_check
      _
    $region43: #{tpu_custom_call.1} parent=1 // pred_check_branch
      %289 = sbr.rel (0) target = $region45
    $region44: #{tpu_custom_call.1} parent=1 // pred_region
      %290 = dma.done [#allocation5], 256
    $region45: #{tpu_custom_call.1} parent=1 // pred_fallthru
      _
    %291 = vsyncpa [#allocation4], 1
    %292 = vsyncpa [#allocation5], 1
    %293 = vsyncpa [#allocation6], 1
    %294 = vsyncpa [#allocation8], 1

</llo_original>
